<compile_context>
chip_gen: v7x
topology: tpu7x:2x2x1
jax: 0.10.0
libtpu: 0.0.40
codegen_flags: <defaults>
</compile_context>

<pallas_src>
import numpy as np
import jax
import jax.numpy as jnp
from jax import lax
from jax.experimental import pallas as pl
from jax.experimental.pallas import tpu as pltpu

GN_EPS = 1e-5  # PyTorch GroupNorm default eps


def _mish_f32(x):
    # Mish(x) = x * tanh(softplus(x)) = x * t*(t+2)/(t*(t+2)+2),  t = exp(x).
    # Single EUP exp + one divide; clamp avoids exp overflow (Mish(x)~=x there).
    t = jnp.exp(jnp.minimum(x, 20.0))
    num = t * (t + 2.0)
    y = x * num / (num + 2.0)
    return jnp.where(x > 20.0, x, y)


# ----------------------------- Pallas kernel ------------------------------- #

def make_conv1d_block_kernel(batch_tile, L_out, KC, C_out, n_groups):
    gs = C_out // n_groups
    inv_count = 1.0 / float(L_out * gs)

    def kernel(x_ref, w_ref, b_ref, gamma_ref, beta_ref, pool_ref, out_ref):
        # x_ref     : (Bt, L_out, KC)      im2col slab, compute dtype
        # w_ref     : (KC, C_out)          fused-tap weights (resident)
        # b_ref     : (1, C_out)           conv bias (f32)
        # gamma_ref : (1, C_out)           GroupNorm weight (f32)
        # beta_ref  : (1, C_out)           GroupNorm bias (f32)
        # pool_ref  : (C_out, C_out)       block-diag group mask (f32, resident)
        # out_ref   : (Bt, L_out, C_out)
        w = w_ref[...]
        bias = b_ref[...]
        gamma = gamma_ref[...]
        beta = beta_ref[...]
        pool = pool_ref[...]

        for i in range(batch_tile):  # small, static unroll
            # ---- Conv1d: one MXU matmul, contraction K = k*C_in, f32 acc ----
            h = jnp.dot(x_ref[i], w,
                        preferred_element_type=jnp.float32) + bias   # (L_out, C_out)

            # ---- GroupNorm: spatial reduce first, then tiny group-pool matmul ----
            sum_c = jnp.sum(h, axis=0, keepdims=True)                 # (1, C_out)
            mean_c = jnp.dot(sum_c, pool,
                             preferred_element_type=jnp.float32) * inv_count
            centered = h - mean_c
            sq_c = jnp.sum(centered * centered, axis=0, keepdims=True)
            var_c = jnp.dot(sq_c, pool,
                            preferred_element_type=jnp.float32) * inv_count
            scale = lax.rsqrt(var_c + GN_EPS) * gamma                 # (1, C_out)
            y = centered * scale + beta

            # ---- Mish (1 exp), lane-dense store along the C_out lane axis ----
            out_ref[i] = _mish_f32(y).astype(out_ref.dtype)

    return kernel


# ------------------------------ JAX wrapper -------------------------------- #

def conv1d_block(x, weight, bias, gamma, beta, *, n_groups=8,
                 compute_dtype=jnp.float32, batch_tile=None):
    """Conv1d(padding=k//2) -> GroupNorm(n_groups) -> Mish.

    x      : (B, C_in, L)       (PyTorch layout)
    weight : (C_out, C_in, k)   (PyTorch Conv1d layout)
    bias, gamma, beta : (C_out,)
    returns (B, C_out, L_out)   (PyTorch layout)
    """
    B, C_in, L = x.shape
    C_out, C_in_w, k = weight.shape
    assert C_in_w == C_in and C_out % n_groups == 0
    pad = k // 2
    L_out = L + 2 * pad - (k - 1)
    KC = k * C_in

    # ---- Layout / im2col prep (wrapper side) ----
    x_pad = jnp.pad(x, ((0, 0), (0, 0), (pad, pad)))                 # (B, C_in, L_pad)
    x_cl = jnp.transpose(x_pad, (0, 2, 1))                           # (B, L_pad, C_in)
    x_col = jnp.concatenate([x_cl[:, dk:dk + L_out, :] for dk in range(k)],
                            axis=-1).astype(compute_dtype)           # (B, L_out, k*C_in)
    w2 = jnp.transpose(weight, (2, 1, 0)).reshape(KC, C_out).astype(compute_dtype)
    b2 = bias.reshape(1, C_out).astype(jnp.float32)
    g2 = gamma.reshape(1, C_out).astype(jnp.float32)
    be2 = beta.reshape(1, C_out).astype(jnp.float32)

    # Resident block-diagonal group-pool mask (precomputed, DMA'd once).
    gids = np.arange(C_out) // (C_out // n_groups)
    pool = jnp.asarray((gids[:, None] == gids[None, :]).astype(np.float32))

    # ---- Batch tiling, budgeted against v7x's 32 MiB scoped VMEM default ----
    in_sz = jnp.dtype(compute_dtype).itemsize

    def step_bytes(bt):
        return (2 * bt * L_out * (KC * in_sz + C_out * 4)            # dbl-buffered in/out
                + KC * C_out * in_sz + C_out * C_out * 4 + 3 * C_out * 4)

    if batch_tile is None:
        batch_tile = 8
    batch_tile = max(1, min(batch_tile, B))
    while batch_tile > 1 and step_bytes(batch_tile) > 8 * 1024 * 1024:
        batch_tile -= 1

    n_steps = pl.cdiv(B, batch_tile)
    Bp = n_steps * batch_tile
    if Bp > B:
        x_col = jnp.pad(x_col, ((0, Bp - B), (0, 0), (0, 0)))

    kernel = make_conv1d_block_kernel(batch_tile, L_out, KC, C_out, n_groups)

    cost = pl.CostEstimate(
        flops=int(2 * Bp * L_out * KC * C_out + 4 * Bp * C_out * C_out
                  + 10 * Bp * L_out * C_out),
        transcendentals=int(2 * Bp * L_out * C_out + Bp * C_out),
        bytes_accessed=int(Bp * L_out * KC * in_sz + KC * C_out * in_sz
                           + C_out * C_out * 4 + 3 * C_out * 4
                           + Bp * L_out * C_out * 4),
    )

    out = pl.pallas_call(
        kernel,
        out_shape=jax.ShapeDtypeStruct((Bp, L_out, C_out), jnp.float32),
        grid=(n_steps,),
        in_specs=[
            pl.BlockSpec((batch_tile, L_out, KC), lambda b: (b, 0, 0)),   # batch tile
            pl.BlockSpec((KC, C_out), lambda b: (0, 0)),                  # resident W
            pl.BlockSpec((1, C_out), lambda b: (0, 0)),                   # resident bias
            pl.BlockSpec((1, C_out), lambda b: (0, 0)),                   # resident gamma
            pl.BlockSpec((1, C_out), lambda b: (0, 0)),                   # resident beta
            pl.BlockSpec((C_out, C_out), lambda b: (0, 0)),               # resident pool
        ],
        out_specs=pl.BlockSpec((batch_tile, L_out, C_out), lambda b: (b, 0, 0)),
        compiler_params=pltpu.CompilerParams(
            dimension_semantics=("parallel",),
            vmem_limit_bytes=32 * 1024 * 1024),
        cost_estimate=cost,
    )(x_col, w2, b2, g2, be2, pool)

    # Back to the PyTorch (B, C_out, L_out) layout.
    return jnp.transpose(out[:B], (0, 2, 1))


# --------------------------- pure-JAX reference ----------------------------- #

def reference(x, weight, bias, gamma, beta, n_groups):
    k = weight.shape[-1]
    pad = k // 2
    y = lax.conv_general_dilated(
        x, weight, window_strides=(1,), padding=[(pad, pad)],
        dimension_numbers=("NCH", "OIH", "NCH"))
    y = y + bias[None, :, None]
    B, C_out, L_out = y.shape
    gs = C_out // n_groups
    yg = y.reshape(B, n_groups, gs, L_out)
    mu = yg.mean(axis=(2, 3), keepdims=True)
    var = ((yg - mu) ** 2).mean(axis=(2, 3), keepdims=True)
    yn = ((yg - mu) / jnp.sqrt(var + GN_EPS)).reshape(B, C_out, L_out)
    yn = yn * gamma[None, :, None] + beta[None, :, None]
    sp = jnp.maximum(yn, 0.0) + jnp.log1p(jnp.exp(-jnp.abs(yn)))
    return yn * jnp.tanh(sp)


# ----------------------------------- main ----------------------------------- #

if __name__ == "__main__":
    key = jax.random.PRNGKey(0)
    B, C_in, C_out, L, k, n_groups = 2, 4, 32, 16, 5, 8

    kx, kw, kb, kg, kbe = jax.random.split(key, 5)
    x = jax.random.normal(kx, (B, C_in, L), jnp.float32)
    bound = 1.0 / np.sqrt(C_in * k)                    # PyTorch Conv1d default init
    weight = jax.random.uniform(kw, (C_out, C_in, k), jnp.float32, -bound, bound)
    bias = jax.random.uniform(kb, (C_out,), jnp.float32, -bound, bound)
    gamma = 1.0 + 0.1 * jax.random.normal(kg, (C_out,), jnp.float32)
    beta = 0.1 * jax.random.normal(kbe, (C_out,), jnp.float32)

    ref = reference(x, weight, bias, gamma, beta, n_groups)

    # Strict f32 path.
    out_f32 = conv1d_block(x, weight, bias, gamma, beta,
                           n_groups=n_groups, compute_dtype=jnp.float32)
    out_f32 = jax.block_until_ready(out_f32)
    np.testing.assert_allclose(np.asarray(out_f32), np.asarray(ref),
                               rtol=1e-4, atol=1e-4)

    # bf16 MXU-operand path (f32 accumulation, f32 GroupNorm/Mish).
    out_bf16 = conv1d_block(x, weight, bias, gamma, beta,
                            n_groups=n_groups, compute_dtype=jnp.bfloat16)
    out_bf16 = jax.block_until_ready(out_bf16)
    np.testing.assert_allclose(np.asarray(out_bf16), np.asarray(ref),
                               rtol=3e-2, atol=3e-2)
    assert np.all(np.isfinite(np.asarray(out_f32)))

    print("KERNEL_OK")
</pallas_src>

<mosaic_0001>
module attributes {stable_mosaic.version = 11 : i64} {
  func.func @kernel(%arg0: i32, %arg1: memref<2x16x20xf32, #tpu.memory_space<vmem>>, %arg2: memref<20x32xf32, #tpu.memory_space<vmem>>, %arg3: memref<1x32xf32, #tpu.memory_space<vmem>>, %arg4: memref<1x32xf32, #tpu.memory_space<vmem>>, %arg5: memref<1x32xf32, #tpu.memory_space<vmem>>, %arg6: memref<32x32xf32, #tpu.memory_space<vmem>>, %arg7: memref<2x16x32xf32, #tpu.memory_space<vmem>>) attributes {dimension_semantics = [#tpu.dimension_semantics<parallel>], iteration_bounds = array<i64: 1>, scalar_prefetch = 0 : i64, scratch_operands = 0 : i64, tpu.core_type = #tpu.core_type<tc>, window_params = [{transform_indices = @transform_0, window_bounds = array<i64: 2, 16, 20>}, {pipeline_mode = #tpu.pipeline_mode<synchronous>, transform_indices = @transform_1, window_bounds = array<i64: 20, 32>}, {pipeline_mode = #tpu.pipeline_mode<synchronous>, transform_indices = @transform_2, window_bounds = array<i64: 1, 32>}, {pipeline_mode = #tpu.pipeline_mode<synchronous>, transform_indices = @transform_3, window_bounds = array<i64: 1, 32>}, {pipeline_mode = #tpu.pipeline_mode<synchronous>, transform_indices = @transform_4, window_bounds = array<i64: 1, 32>}, {pipeline_mode = #tpu.pipeline_mode<synchronous>, transform_indices = @transform_5, window_bounds = array<i64: 32, 32>}, {transform_indices = @transform_6, window_bounds = array<i64: 2, 16, 32>}]} {
    %c0 = arith.constant 0 : index
    %c0_0 = arith.constant 0 : index
    %0 = vector.load %arg2[%c0, %c0_0] : memref<20x32xf32, #tpu.memory_space<vmem>>, vector<20x32xf32>
    %c0_1 = arith.constant 0 : index
    %c0_2 = arith.constant 0 : index
    %1 = vector.load %arg3[%c0_1, %c0_2] : memref<1x32xf32, #tpu.memory_space<vmem>>, vector<1x32xf32>
    %c0_3 = arith.constant 0 : index
    %c0_4 = arith.constant 0 : index
    %2 = vector.load %arg4[%c0_3, %c0_4] : memref<1x32xf32, #tpu.memory_space<vmem>>, vector<1x32xf32>
    %c0_5 = arith.constant 0 : index
    %c0_6 = arith.constant 0 : index
    %3 = vector.load %arg5[%c0_5, %c0_6] : memref<1x32xf32, #tpu.memory_space<vmem>>, vector<1x32xf32>
    %c0_7 = arith.constant 0 : index
    %c0_8 = arith.constant 0 : index
    %4 = vector.load %arg6[%c0_7, %c0_8] : memref<32x32xf32, #tpu.memory_space<vmem>>, vector<32x32xf32>
    %c0_9 = arith.constant 0 : index
    %c0_10 = arith.constant 0 : index
    %c0_11 = arith.constant 0 : index
    %5 = vector.load %arg1[%c0_9, %c0_10, %c0_11] : memref<2x16x20xf32, #tpu.memory_space<vmem>>, vector<1x16x20xf32>
    %6 = vector.shape_cast %5 : vector<1x16x20xf32> to vector<16x20xf32>
    %cst = arith.constant dense<0.000000e+00> : vector<16x32xf32>
    %7 = tpu.matmul %6, %0, %cst {dimension_numbers = #tpu.dot_dimension_numbers<[1], [0], [0], [1], [0, 0, 1, 1], [], []>} : vector<16x20xf32>, vector<20x32xf32>, vector<16x32xf32> -> vector<16x32xf32>
    %8 = vector.broadcast %1 : vector<1x32xf32> to vector<16x32xf32>
    %9 = arith.addf %7, %8 : vector<16x32xf32>
    %cst_12 = arith.constant dense<0.000000e+00> : vector<32xf32>
    %10 = vector.multi_reduction <add>, %9, %cst_12 [0] : vector<16x32xf32> to vector<32xf32>
    %11 = vector.shape_cast %10 : vector<32xf32> to vector<1x32xf32>
    %cst_13 = arith.constant dense<0.000000e+00> : vector<1x32xf32>
    %12 = tpu.matmul %11, %4, %cst_13 {dimension_numbers = #tpu.dot_dimension_numbers<[1], [0], [0], [1], [0, 0, 1, 1], [], []>} : vector<1x32xf32>, vector<32x32xf32>, vector<1x32xf32> -> vector<1x32xf32>
    %cst_14 = arith.constant 1.562500e-02 : f32
    %13 = vector.broadcast %cst_14 : f32 to vector<1x32xf32>
    %14 = arith.mulf %12, %13 : vector<1x32xf32>
    %15 = vector.broadcast %14 : vector<1x32xf32> to vector<16x32xf32>
    %16 = arith.subf %9, %15 : vector<16x32xf32>
    %17 = arith.mulf %16, %16 : vector<16x32xf32>
    %cst_15 = arith.constant dense<0.000000e+00> : vector<32xf32>
    %18 = vector.multi_reduction <add>, %17, %cst_15 [0] : vector<16x32xf32> to vector<32xf32>
    %19 = vector.shape_cast %18 : vector<32xf32> to vector<1x32xf32>
    %cst_16 = arith.constant dense<0.000000e+00> : vector<1x32xf32>
    %20 = tpu.matmul %19, %4, %cst_16 {dimension_numbers = #tpu.dot_dimension_numbers<[1], [0], [0], [1], [0, 0, 1, 1], [], []>} : vector<1x32xf32>, vector<32x32xf32>, vector<1x32xf32> -> vector<1x32xf32>
    %cst_17 = arith.constant 1.562500e-02 : f32
    %21 = vector.broadcast %cst_17 : f32 to vector<1x32xf32>
    %22 = arith.mulf %20, %21 : vector<1x32xf32>
    %cst_18 = arith.constant 9.99999974E-6 : f32
    %23 = vector.broadcast %cst_18 : f32 to vector<1x32xf32>
    %24 = arith.addf %22, %23 : vector<1x32xf32>
    %25 = math.rsqrt %24 : vector<1x32xf32>
    %26 = arith.mulf %25, %2 : vector<1x32xf32>
    %27 = vector.broadcast %26 : vector<1x32xf32> to vector<16x32xf32>
    %28 = arith.mulf %16, %27 : vector<16x32xf32>
    %29 = vector.broadcast %3 : vector<1x32xf32> to vector<16x32xf32>
    %30 = arith.addf %28, %29 : vector<16x32xf32>
    %cst_19 = arith.constant 2.000000e+01 : f32
    %31 = vector.broadcast %cst_19 : f32 to vector<16x32xf32>
    %32 = arith.minimumf %30, %31 : vector<16x32xf32>
    %33 = math.exp %32 : vector<16x32xf32>
    %cst_20 = arith.constant 2.000000e+00 : f32
    %34 = vector.broadcast %cst_20 : f32 to vector<16x32xf32>
    %35 = arith.addf %33, %34 : vector<16x32xf32>
    %36 = arith.mulf %33, %35 : vector<16x32xf32>
    %37 = arith.mulf %30, %36 : vector<16x32xf32>
    %cst_21 = arith.constant 2.000000e+00 : f32
    %38 = vector.broadcast %cst_21 : f32 to vector<16x32xf32>
    %39 = arith.addf %36, %38 : vector<16x32xf32>
    %40 = arith.divf %37, %39 : vector<16x32xf32>
    %cst_22 = arith.constant 2.000000e+01 : f32
    %41 = vector.broadcast %cst_22 : f32 to vector<16x32xf32>
    %42 = arith.cmpf ogt, %30, %41 : vector<16x32xf32>
    %43 = arith.select %42, %30, %40 : vector<16x32xi1>, vector<16x32xf32>
    %c0_23 = arith.constant 0 : index
    %c0_24 = arith.constant 0 : index
    %c0_25 = arith.constant 0 : index
    %44 = vector.load %arg7[%c0_23, %c0_24, %c0_25] : memref<2x16x32xf32, #tpu.memory_space<vmem>>, vector<1x16x32xf32>
    %45 = vector.shape_cast %44 : vector<1x16x32xf32> to vector<16x32xf32>
    %46 = vector.shape_cast %43 : vector<16x32xf32> to vector<1x16x32xf32>
    tpu.vector_store %arg7[%c0_23, %c0_24, %c0_25], %46 {strides = array<i32>} : memref<2x16x32xf32, #tpu.memory_space<vmem>>, vector<1x16x32xf32>,
    %c1 = arith.constant 1 : index
    %c0_26 = arith.constant 0 : index
    %c0_27 = arith.constant 0 : index
    %47 = vector.load %arg1[%c1, %c0_26, %c0_27] : memref<2x16x20xf32, #tpu.memory_space<vmem>>, vector<1x16x20xf32>
    %48 = vector.shape_cast %47 : vector<1x16x20xf32> to vector<16x20xf32>
    %cst_28 = arith.constant dense<0.000000e+00> : vector<16x32xf32>
    %49 = tpu.matmul %48, %0, %cst_28 {dimension_numbers = #tpu.dot_dimension_numbers<[1], [0], [0], [1], [0, 0, 1, 1], [], []>} : vector<16x20xf32>, vector<20x32xf32>, vector<16x32xf32> -> vector<16x32xf32>
    %50 = vector.broadcast %1 : vector<1x32xf32> to vector<16x32xf32>
    %51 = arith.addf %49, %50 : vector<16x32xf32>
    %cst_29 = arith.constant dense<0.000000e+00> : vector<32xf32>
    %52 = vector.multi_reduction <add>, %51, %cst_29 [0] : vector<16x32xf32> to vector<32xf32>
    %53 = vector.shape_cast %52 : vector<32xf32> to vector<1x32xf32>
    %cst_30 = arith.constant dense<0.000000e+00> : vector<1x32xf32>
    %54 = tpu.matmul %53, %4, %cst_30 {dimension_numbers = #tpu.dot_dimension_numbers<[1], [0], [0], [1], [0, 0, 1, 1], [], []>} : vector<1x32xf32>, vector<32x32xf32>, vector<1x32xf32> -> vector<1x32xf32>
    %cst_31 = arith.constant 1.562500e-02 : f32
    %55 = vector.broadcast %cst_31 : f32 to vector<1x32xf32>
    %56 = arith.mulf %54, %55 : vector<1x32xf32>
    %57 = vector.broadcast %56 : vector<1x32xf32> to vector<16x32xf32>
    %58 = arith.subf %51, %57 : vector<16x32xf32>
    %59 = arith.mulf %58, %58 : vector<16x32xf32>
    %cst_32 = arith.constant dense<0.000000e+00> : vector<32xf32>
    %60 = vector.multi_reduction <add>, %59, %cst_32 [0] : vector<16x32xf32> to vector<32xf32>
    %61 = vector.shape_cast %60 : vector<32xf32> to vector<1x32xf32>
    %cst_33 = arith.constant dense<0.000000e+00> : vector<1x32xf32>
    %62 = tpu.matmul %61, %4, %cst_33 {dimension_numbers = #tpu.dot_dimension_numbers<[1], [0], [0], [1], [0, 0, 1, 1], [], []>} : vector<1x32xf32>, vector<32x32xf32>, vector<1x32xf32> -> vector<1x32xf32>
    %cst_34 = arith.constant 1.562500e-02 : f32
    %63 = vector.broadcast %cst_34 : f32 to vector<1x32xf32>
    %64 = arith.mulf %62, %63 : vector<1x32xf32>
    %cst_35 = arith.constant 9.99999974E-6 : f32
    %65 = vector.broadcast %cst_35 : f32 to vector<1x32xf32>
    %66 = arith.addf %64, %65 : vector<1x32xf32>
    %67 = math.rsqrt %66 : vector<1x32xf32>
    %68 = arith.mulf %67, %2 : vector<1x32xf32>
    %69 = vector.broadcast %68 : vector<1x32xf32> to vector<16x32xf32>
    %70 = arith.mulf %58, %69 : vector<16x32xf32>
    %71 = vector.broadcast %3 : vector<1x32xf32> to vector<16x32xf32>
    %72 = arith.addf %70, %71 : vector<16x32xf32>
    %cst_36 = arith.constant 2.000000e+01 : f32
    %73 = vector.broadcast %cst_36 : f32 to vector<16x32xf32>
    %74 = arith.minimumf %72, %73 : vector<16x32xf32>
    %75 = math.exp %74 : vector<16x32xf32>
    %cst_37 = arith.constant 2.000000e+00 : f32
    %76 = vector.broadcast %cst_37 : f32 to vector<16x32xf32>
    %77 = arith.addf %75, %76 : vector<16x32xf32>
    %78 = arith.mulf %75, %77 : vector<16x32xf32>
    %79 = arith.mulf %72, %78 : vector<16x32xf32>
    %cst_38 = arith.constant 2.000000e+00 : f32
    %80 = vector.broadcast %cst_38 : f32 to vector<16x32xf32>
    %81 = arith.addf %78, %80 : vector<16x32xf32>
    %82 = arith.divf %79, %81 : vector<16x32xf32>
    %cst_39 = arith.constant 2.000000e+01 : f32
    %83 = vector.broadcast %cst_39 : f32 to vector<16x32xf32>
    %84 = arith.cmpf ogt, %72, %83 : vector<16x32xf32>
    %85 = arith.select %84, %72, %82 : vector<16x32xi1>, vector<16x32xf32>
    %c1_40 = arith.constant 1 : index
    %c0_41 = arith.constant 0 : index
    %c0_42 = arith.constant 0 : index
    %86 = vector.load %arg7[%c1_40, %c0_41, %c0_42] : memref<2x16x32xf32, #tpu.memory_space<vmem>>, vector<1x16x32xf32>
    %87 = vector.shape_cast %86 : vector<1x16x32xf32> to vector<16x32xf32>
    %88 = vector.shape_cast %85 : vector<16x32xf32> to vector<1x16x32xf32>
    tpu.vector_store %arg7[%c1_40, %c0_41, %c0_42], %88 {strides = array<i32>} : memref<2x16x32xf32, #tpu.memory_space<vmem>>, vector<1x16x32xf32>,
    return
  }
  func.func @transform_0(%arg0: i32) -> (i32, i32, i32) {
    %c0_i32 = arith.constant 0 : i32
    %c0_i32_0 = arith.constant 0 : i32
    %c0_i32_1 = arith.constant 0 : i32
    return %arg0, %c0_i32, %c0_i32_0 : i32, i32, i32
  }
  func.func @transform_1(%arg0: i32) -> (i32, i32) {
    %c0_i32 = arith.constant 0 : i32
    %c0_i32_0 = arith.constant 0 : i32
    %c0_i32_1 = arith.constant 0 : i32
    return %c0_i32, %c0_i32_0 : i32, i32
  }
  func.func @transform_2(%arg0: i32) -> (i32, i32) {
    %c0_i32 = arith.constant 0 : i32
    %c0_i32_0 = arith.constant 0 : i32
    %c0_i32_1 = arith.constant 0 : i32
    return %c0_i32, %c0_i32_0 : i32, i32
  }
  func.func @transform_3(%arg0: i32) -> (i32, i32) {
    %c0_i32 = arith.constant 0 : i32
    %c0_i32_0 = arith.constant 0 : i32
    %c0_i32_1 = arith.constant 0 : i32
    return %c0_i32, %c0_i32_0 : i32, i32
  }
  func.func @transform_4(%arg0: i32) -> (i32, i32) {
    %c0_i32 = arith.constant 0 : i32
    %c0_i32_0 = arith.constant 0 : i32
    %c0_i32_1 = arith.constant 0 : i32
    return %c0_i32, %c0_i32_0 : i32, i32
  }
  func.func @transform_5(%arg0: i32) -> (i32, i32) {
    %c0_i32 = arith.constant 0 : i32
    %c0_i32_0 = arith.constant 0 : i32
    %c0_i32_1 = arith.constant 0 : i32
    return %c0_i32, %c0_i32_0 : i32, i32
  }
  func.func @transform_6(%arg0: i32) -> (i32, i32, i32) {
    %c0_i32 = arith.constant 0 : i32
    %c0_i32_0 = arith.constant 0 : i32
    %c0_i32_1 = arith.constant 0 : i32
    return %arg0, %c0_i32, %c0_i32_0 : i32, i32, i32
  }
}

</mosaic_0001>

<llo_original>
// kernel: tpu_custom_call.1
$region0: #{tpu_custom_call.1}
  #allocation0 [shape = 'u32[]', space=smem, size = 0x4, offset = 0x4, fixed_abs, tag = 'smem constant byte address 0x4 - core index']
  #allocation1 [shape = 'u32[144,128]{1,0:T(1,128)}', space=vmem, size = 0x12000, scoped, tag = 'internal scratch']
  %s0 = inlined_call_operand.hbm [shape: f32[2,16,20], index: 0, kind: input, shape index: {}]
  %s1 = inlined_call_operand.hbm [shape: f32[20,32], index: 1, kind: input, shape index: {}]
  %s2 = inlined_call_operand.vmem [shape: f32[1,32], index: 2, kind: input, shape index: {}]
  %s3 = inlined_call_operand.vmem [shape: f32[1,32], index: 3, kind: input, shape index: {}]
  %s4 = inlined_call_operand.vmem [shape: f32[1,32], index: 4, kind: input, shape index: {}]
  %s5 = inlined_call_operand.hbm [shape: f32[32,32], index: 5, kind: input, shape index: {}]
  %s6 = inlined_call_operand.hbm [shape: f32[2,16,32], index: 6, kind: output, shape index: {}]
  %s7 = sld [smem:[#allocation0]]
  $region46: #{tpu_custom_call.1} parent=0
    _
  %s9 = ssub.s32 1, %s7
  %s10 = scalar_select 0, %s9, %s7
  $region1: #{tpu_custom_call.1} parent=0
    #allocation2 [shape = 'u8[16384]{0}', space=vmem, size = 0x4000, scoped, tag = 'input window, operand 0, single buffered']
    #allocation3 [shape = 's32[1]{0}', space=sflag, size = 0x4, scoped, tag = 'scoped memory for tpu_custom_call.1']
    #allocation4 [shape = 's32[1]{0}', space=sflag, size = 0x4, scoped, tag = 'scoped memory for tpu_custom_call.1']
    #allocation5 [shape = 'u8[12288]{0}', space=vmem, size = 0x3000, scoped, tag = 'input window, operand 1, single buffered']
    #allocation6 [shape = 's32[1]{0}', space=sflag, size = 0x4, scoped, tag = 'scoped memory for tpu_custom_call.1']
    #allocation7 [shape = 'u8[16384]{0}', space=vmem, size = 0x4000, scoped, tag = 'input window, operand 5, single buffered']
    #allocation8 [shape = 'u8[16384]{0}', space=vmem, size = 0x4000, scoped, tag = 'output window, operand 0, single buffered']
    %11 = vsyncpa [#allocation3], 0
    %12 = vsyncpa [#allocation6], 0
    %13 = vsyncpa [#allocation4], 0
    // Predicated region
    $region2: #{tpu_custom_call.1} parent=1 // pred_check
      _
    $region3: #{tpu_custom_call.1} parent=1 // pred_check_branch
      %15 = sbr.rel (0) target = $region5
    $region4: #{tpu_custom_call.1} parent=1 // pred_region
      %s17 = ssub.s32 512, 512
      %18 = vsyncadd [#allocation3], %s17
      %s19 = sshll.u32 [#allocation2], 4
      %s20 = int_to_ptr.vmem [resolvable:$true] %s19
      %25 = dma.hbm_to_vmem [thread:$0]  %s0, 512, %s20, [#allocation3], 128, 128, 8
    $region5: #{tpu_custom_call.1} parent=1 // pred_fallthru
      _
    // Predicated region
    $region6: #{tpu_custom_call.1} parent=1 // pred_check
      _
    $region7: #{tpu_custom_call.1} parent=1 // pred_check_branch
      %27 = sbr.rel (0) target = $region9
    $region8: #{tpu_custom_call.1} parent=1 // pred_region
      %s29 = ssub.s32 384, 384
      %30 = vsyncadd [#allocation6], %s29
      %s31 = sshll.u32 [#allocation5], 4
      %s32 = int_to_ptr.vmem [resolvable:$true] %s31
      %37 = dma.hbm_to_vmem [thread:$0]  %s1, 384, %s32, [#allocation6], 128, 128, 8
    $region9: #{tpu_custom_call.1} parent=1 // pred_fallthru
      _
    // Predicated region
    $region10: #{tpu_custom_call.1} parent=1 // pred_check
      _
    $region11: #{tpu_custom_call.1} parent=1 // pred_check_branch
      %39 = sbr.rel (0) target = $region13
    $region12: #{tpu_custom_call.1} parent=1 // pred_region
      _
    $region13: #{tpu_custom_call.1} parent=1 // pred_fallthru
      _
    // Predicated region
    $region14: #{tpu_custom_call.1} parent=1 // pred_check
      _
    $region15: #{tpu_custom_call.1} parent=1 // pred_check_branch
      %41 = sbr.rel (0) target = $region17
    $region16: #{tpu_custom_call.1} parent=1 // pred_region
      _
    $region17: #{tpu_custom_call.1} parent=1 // pred_fallthru
      _
    // Predicated region
    $region18: #{tpu_custom_call.1} parent=1 // pred_check
      _
    $region19: #{tpu_custom_call.1} parent=1 // pred_check_branch
      %43 = sbr.rel (0) target = $region21
    $region20: #{tpu_custom_call.1} parent=1 // pred_region
      _
    $region21: #{tpu_custom_call.1} parent=1 // pred_fallthru
      _
    // Predicated region
    $region22: #{tpu_custom_call.1} parent=1 // pred_check
      _
    $region23: #{tpu_custom_call.1} parent=1 // pred_check_branch
      %45 = sbr.rel (0) target = $region25
    $region24: #{tpu_custom_call.1} parent=1 // pred_region
      %s47 = ssub.s32 512, 512
      %48 = vsyncadd [#allocation6], %s47
      %s49 = sshll.u32 [#allocation7], 4
      %s50 = int_to_ptr.vmem [resolvable:$true] %s49
      %55 = dma.hbm_to_vmem [thread:$0]  %s5, 512, %s50, [#allocation6], 128, 128, 8
    $region25: #{tpu_custom_call.1} parent=1 // pred_fallthru
      _
    // Predicated region
    $region26: #{tpu_custom_call.1} parent=1 // pred_check
      _
    $region27: #{tpu_custom_call.1} parent=1 // pred_check_branch
      %57 = sbr.rel (0) target = $region29
    $region28: #{tpu_custom_call.1} parent=1 // pred_region
      %58 = dma.done [#allocation3], 512
    $region29: #{tpu_custom_call.1} parent=1 // pred_fallthru
      _
    // Predicated region
    $region30: #{tpu_custom_call.1} parent=1 // pred_check
      _
    $region31: #{tpu_custom_call.1} parent=1 // pred_check_branch
      %60 = sbr.rel (0) target = $region33
    $region32: #{tpu_custom_call.1} parent=1 // pred_region
      %61 = dma.done [#allocation6], 384
    $region33: #{tpu_custom_call.1} parent=1 // pred_fallthru
      _
    // Predicated region
    $region34: #{tpu_custom_call.1} parent=1 // pred_check
      _
    $region35: #{tpu_custom_call.1} parent=1 // pred_check_branch
      %63 = sbr.rel (0) target = $region37
    $region36: #{tpu_custom_call.1} parent=1 // pred_region
      %64 = dma.done [#allocation6], 512
    $region37: #{tpu_custom_call.1} parent=1 // pred_fallthru
      _
    %v65 = vld [vmem:[#allocation5] sm:$0xff]
    %v66 = vld [vmem:[#allocation5 + $0x8] sm:$0xff]
    %v67 = vld [vmem:[#allocation5 + $0x10] sm:$0xf]
    %v68 = vld [vmem:[%s2] sm:$0x1]
    %v69 = vld [vmem:[%s3] sm:$0x1]
    %v70 = vld [vmem:[%s4] sm:$0x1]
    %v71 = vld [vmem:[#allocation7] sm:$0xff]
    %v72 = vld [vmem:[#allocation7 + $0x8] sm:$0xff]
    %v73 = vld [vmem:[#allocation7 + $0x10] sm:$0xff]
    %v74 = vld [vmem:[#allocation7 + $0x18] sm:$0xff]
    %v75 = vld [vmem:[#allocation2] sm:$0xff]
    %v76 = vld [vmem:[#allocation2 + $0x8] sm:$0xff]
    %v78 = vlaneseq
    %v79 = vshrl.u32 %v78, 7
    %v80 = vsub.s32 0, %v79
    %v81 = vrot.slane %v68, %v80
    %vm83 = vcmask 162816
    %v85 = vsel %vm83, %v75, 0
    %v88 = vsel %vm83, %v76, 0
    %vm90 = vcmask 1043456
    %v92 = vsel %vm90, %v67, 0
    %94 = vmatprep.subr.mxu0 0.0
    %95 = vmatpush1.msra.mxu0 %v65
    %96 = vmatprep.subr.mxu0 0.0
    %97 = vmatpush1.msra.mxu0 %v66
    %98 = vmatprep.subr.mxu0 0.0
    %99 = vmatpush1.msra.mxu0 %v92
    %100 = vmatprep.subr.mxu0 0.0
    %101 = vmatpush1.msra.mxu0 0.0
    %102 = vmatprep.subr.mxu0 0.0
    %103 = vmatpush1.msra.mxu0 0.0
    %104 = vmatprep.subr.mxu0 0.0
    %105 = vmatpush1.msra.mxu0 0.0
    %106 = vmatprep.subr.mxu0 0.0
    %107 = vmatpush1.msra.mxu0 0.0
    %108 = vmatprep.subr.mxu0 0.0
    %109 = vmatpush1.msra.mxu0 0.0
    %110 = vmatprep.subr.mxu0 0.0
    %111 = vmatpush1.msra.mxu0 0.0
    %112 = vmatprep.subr.mxu0 0.0
    %113 = vmatpush1.msra.mxu0 0.0
    %114 = vmatprep.subr.mxu0 0.0
    %115 = vmatpush1.msra.mxu0 0.0
    %116 = vmatprep.subr.mxu0 0.0
    %117 = vmatpush1.msra.mxu0 0.0
    %118 = vmatprep.subr.mxu0 0.0
    %119 = vmatpush1.msra.mxu0 0.0
    %120 = vmatprep.subr.mxu0 0.0
    %121 = vmatpush1.msra.mxu0 0.0
    %122 = vmatprep.subr.mxu0 0.0
    %123 = vmatpush1.msra.mxu0 0.0
    %124 = vmatprep.subr.mxu0 0.0
    %125 = vmatpush1.msra.mxu0 0.0
    %126 = vmatprep.subr.mxu0 0.0
    %127 = vmatpush1.msra.mxu0 0.0
    %128 = vmatprep.subr.mxu0 0.0
    %129 = vmatpush1.msra.mxu0 0.0
    %130 = vmatprep.subr.mxu0 0.0
    %131 = vmatpush1.msra.mxu0 0.0
    %132 = vmatprep.subr.mxu0 0.0
    %133 = vmatpush1.msra.mxu0 0.0
    %134 = vmatprep.subr.mxu0 0.0
    %135 = vmatpush1.msra.mxu0 0.0
    %136 = vmatprep.subr.mxu0 0.0
    %137 = vmatpush1.msra.mxu0 0.0
    %138 = vmatprep.subr.mxu0 0.0
    %139 = vmatpush1.msra.mxu0 0.0
    %140 = vmatprep.subr.mxu0 0.0
    %141 = vmatpush1.msra.mxu0 0.0
    %142 = vmatprep.subr.mxu0 0.0
    %143 = vmatpush1.msra.mxu0 0.0
    %144 = vmatprep.subr.mxu0 0.0
    %145 = vmatpush1.msra.mxu0 0.0
    %146 = vmatprep.subr.mxu0 0.0
    %147 = vmatpush1.msra.mxu0 0.0
    %148 = vmatprep.subr.mxu0 0.0
    %149 = vmatpush1.msra.mxu0 0.0
    %150 = vmatprep.subr.mxu0 0.0
    %151 = vmatpush1.msra.mxu0 0.0
    %152 = vmatprep.subr.mxu0 0.0
    %153 = vmatpush1.msra.mxu0 0.0
    %154 = vmatprep.subr.mxu0 0.0
    %155 = vmatpush1.msra.mxu0 0.0
    %156 = vmatprep.subr.mxu0 0.0
    %157 = vmatpush1.msra.mxu0 0.0
    %158 = vmatprep.mubr.f32.mxu0 0.0
    %159 = vmatmul.mubr.f32.gmra.mrb[0].mxu0 %v85
    %v160 = vpop.f32.mrb[0].mxu0
    %v161 = vadd.f32 %v81, %v160
    %v162 = vpop.f32.mrb[0].mxu0
    %163 = vmatprep.mubr.f32.mxu0 0.0
    %164 = vmatmul.mubr.f32.gmra.mrb[0].mxu0 %v88
    %v165 = vpop.f32.mrb[0].mxu0
    %v166 = vadd.f32 %v81, %v165
    %v167 = vpop.f32.mrb[0].mxu0
    %168 = vdwg.mxu0
    %vm169 = vcmask 261120
    %v170 = vsel %vm169, %v161, 0.0
    %v171 = vsel %vm169, %v166, 0.0
    %v172 = vadd.f32 %v170, %v171
    %v173 = vrot.slane %v172, 4
    %v174 = vadd.f32 %v172, %v173
    %v175 = vrot.slane %v174, 2
    %v176 = vadd.f32 %v174, %v175
    %v177 = vrot.slane %v176, 1
    %v178 = vadd.f32 %v176, %v177
    %v180 = vsel %vm169, %v178, 0
    %182 = vmatprep.subr.mxu0 0.0
    %183 = vmatpush1.msra.mxu0 %v71
    %184 = vmatprep.subr.mxu0 0.0
    %185 = vmatpush1.msra.mxu0 %v72
    %186 = vmatprep.subr.mxu0 0.0
    %187 = vmatpush1.msra.mxu0 %v73
    %188 = vmatprep.subr.mxu0 0.0
    %189 = vmatpush1.msra.mxu0 %v74
    %190 = vmatprep.subr.mxu0 0.0
    %191 = vmatpush1.msra.mxu0 0.0
    %192 = vmatprep.subr.mxu0 0.0
    %193 = vmatpush1.msra.mxu0 0.0
    %194 = vmatprep.subr.mxu0 0.0
    %195 = vmatpush1.msra.mxu0 0.0
    %196 = vmatprep.subr.mxu0 0.0
    %197 = vmatpush1.msra.mxu0 0.0
    %198 = vmatprep.subr.mxu0 0.0
    %199 = vmatpush1.msra.mxu0 0.0
    %200 = vmatprep.subr.mxu0 0.0
    %201 = vmatpush1.msra.mxu0 0.0
    %202 = vmatprep.subr.mxu0 0.0
    %203 = vmatpush1.msra.mxu0 0.0
    %204 = vmatprep.subr.mxu0 0.0
    %205 = vmatpush1.msra.mxu0 0.0
    %206 = vmatprep.subr.mxu0 0.0
    %207 = vmatpush1.msra.mxu0 0.0
    %208 = vmatprep.subr.mxu0 0.0
    %209 = vmatpush1.msra.mxu0 0.0
    %210 = vmatprep.subr.mxu0 0.0
    %211 = vmatpush1.msra.mxu0 0.0
    %212 = vmatprep.subr.mxu0 0.0
    %213 = vmatpush1.msra.mxu0 0.0
    %214 = vmatprep.subr.mxu0 0.0
    %215 = vmatpush1.msra.mxu0 0.0
    %216 = vmatprep.subr.mxu0 0.0
    %217 = vmatpush1.msra.mxu0 0.0
    %218 = vmatprep.subr.mxu0 0.0
    %219 = vmatpush1.msra.mxu0 0.0
    %220 = vmatprep.subr.mxu0 0.0
    %221 = vmatpush1.msra.mxu0 0.0
    %222 = vmatprep.subr.mxu0 0.0
    %223 = vmatpush1.msra.mxu0 0.0
    %224 = vmatprep.subr.mxu0 0.0
    %225 = vmatpush1.msra.mxu0 0.0
    %226 = vmatprep.subr.mxu0 0.0
    %227 = vmatpush1.msra.mxu0 0.0
    %228 = vmatprep.subr.mxu0 0.0
    %229 = vmatpush1.msra.mxu0 0.0
    %230 = vmatprep.subr.mxu0 0.0
    %231 = vmatpush1.msra.mxu0 0.0
    %232 = vmatprep.subr.mxu0 0.0
    %233 = vmatpush1.msra.mxu0 0.0
    %234 = vmatprep.subr.mxu0 0.0
    %235 = vmatpush1.msra.mxu0 0.0
    %236 = vmatprep.subr.mxu0 0.0
    %237 = vmatpush1.msra.mxu0 0.0
    %238 = vmatprep.subr.mxu0 0.0
    %239 = vmatpush1.msra.mxu0 0.0
    %240 = vmatprep.subr.mxu0 0.0
    %241 = vmatpush1.msra.mxu0 0.0
    %242 = vmatprep.subr.mxu0 0.0
    %243 = vmatpush1.msra.mxu0 0.0
    %244 = vmatprep.subr.mxu0 0.0
    %245 = vmatpush1.msra.mxu0 0.0
    %246 = vmatprep.mubr.f32.mxu0 0.0
    %247 = vmatmul.mubr.f32.gmra.mrb[0].mxu0 %v180
    %v248 = vpop.f32.mrb[0].mxu0
    %v249 = vadd.f32 0.0, %v248
    %v250 = vpop.f32.mrb[0].mxu0
    %251 = vdwg.mxu0
    %v252 = vmul.f32 %v249, 0.015625
    %v253 = vlaneseq
    %v254 = vshrl.u32 %v253, 7
    %v255 = vsub.s32 0, %v254
    %v256 = vrot.slane %v252, %v255
    %v257 = vsub.f32 %v161, %v256
    %v258 = vsub.f32 %v166, %v256
    %v259 = vmul.f32 %v257, %v257
    %v260 = vmul.f32 %v258, %v258
    %v261 = vsel %vm169, %v259, 0.0
    %v262 = vsel %vm169, %v260, 0.0
    %v263 = vadd.f32 %v261, %v262
    %v264 = vrot.slane %v263, 4
    %v265 = vadd.f32 %v263, %v264
    %v266 = vrot.slane %v265, 2
    %v267 = vadd.f32 %v265, %v266
    %v268 = vrot.slane %v267, 1
    %v269 = vadd.f32 %v267, %v268
    %v271 = vsel %vm169, %v269, 0
    %273 = vmatprep.subr.mxu0 0.0
    %274 = vmatpush1.msra.mxu0 %v71
    %275 = vmatprep.subr.mxu0 0.0
    %276 = vmatpush1.msra.mxu0 %v72
    %277 = vmatprep.subr.mxu0 0.0
    %278 = vmatpush1.msra.mxu0 %v73
    %279 = vmatprep.subr.mxu0 0.0
    %280 = vmatpush1.msra.mxu0 %v74
    %281 = vmatprep.subr.mxu0 0.0
    %282 = vmatpush1.msra.mxu0 0.0
    %283 = vmatprep.subr.mxu0 0.0
    %284 = vmatpush1.msra.mxu0 0.0
    %285 = vmatprep.subr.mxu0 0.0
    %286 = vmatpush1.msra.mxu0 0.0
    %287 = vmatprep.subr.mxu0 0.0
    %288 = vmatpush1.msra.mxu0 0.0
    %289 = vmatprep.subr.mxu0 0.0
    %290 = vmatpush1.msra.mxu0 0.0
    %291 = vmatprep.subr.mxu0 0.0
    %292 = vmatpush1.msra.mxu0 0.0
    %293 = vmatprep.subr.mxu0 0.0
    %294 = vmatpush1.msra.mxu0 0.0
    %295 = vmatprep.subr.mxu0 0.0
    %296 = vmatpush1.msra.mxu0 0.0
    %297 = vmatprep.subr.mxu0 0.0
    %298 = vmatpush1.msra.mxu0 0.0
    %299 = vmatprep.subr.mxu0 0.0
    %300 = vmatpush1.msra.mxu0 0.0
    %301 = vmatprep.subr.mxu0 0.0
    %302 = vmatpush1.msra.mxu0 0.0
    %303 = vmatprep.subr.mxu0 0.0
    %304 = vmatpush1.msra.mxu0 0.0
    %305 = vmatprep.subr.mxu0 0.0
    %306 = vmatpush1.msra.mxu0 0.0
    %307 = vmatprep.subr.mxu0 0.0
    %308 = vmatpush1.msra.mxu0 0.0
    %309 = vmatprep.subr.mxu0 0.0
    %310 = vmatpush1.msra.mxu0 0.0
    %311 = vmatprep.subr.mxu0 0.0
    %312 = vmatpush1.msra.mxu0 0.0
    %313 = vmatprep.subr.mxu0 0.0
    %314 = vmatpush1.msra.mxu0 0.0
    %315 = vmatprep.subr.mxu0 0.0
    %316 = vmatpush1.msra.mxu0 0.0
    %317 = vmatprep.subr.mxu0 0.0
    %318 = vmatpush1.msra.mxu0 0.0
    %319 = vmatprep.subr.mxu0 0.0
    %320 = vmatpush1.msra.mxu0 0.0
    %321 = vmatprep.subr.mxu0 0.0
    %322 = vmatpush1.msra.mxu0 0.0
    %323 = vmatprep.subr.mxu0 0.0
    %324 = vmatpush1.msra.mxu0 0.0
    %325 = vmatprep.subr.mxu0 0.0
    %326 = vmatpush1.msra.mxu0 0.0
    %327 = vmatprep.subr.mxu0 0.0
    %328 = vmatpush1.msra.mxu0 0.0
    %329 = vmatprep.subr.mxu0 0.0
    %330 = vmatpush1.msra.mxu0 0.0
    %331 = vmatprep.subr.mxu0 0.0
    %332 = vmatpush1.msra.mxu0 0.0
    %333 = vmatprep.subr.mxu0 0.0
    %334 = vmatpush1.msra.mxu0 0.0
    %335 = vmatprep.subr.mxu0 0.0
    %336 = vmatpush1.msra.mxu0 0.0
    %337 = vmatprep.mubr.f32.mxu0 0.0
    %338 = vmatmul.mubr.f32.gmra.mrb[0].mxu0 %v271
    %v339 = vpop.f32.mrb[0].mxu0
    %v340 = vadd.f32 0.0, %v339
    %v341 = vpop.f32.mrb[0].mxu0
    %342 = vdwg.mxu0
    %v343 = vmul.f32 %v340, 0.015625
    %v344 = vadd.f32 %v343, 1e-05
    %v345 = vrsqrt.pop %v344
    %v346 = vmul.f32 %v345, %v69
    %v347 = vlaneseq
    %v348 = vshrl.u32 %v347, 7
    %v349 = vsub.s32 0, %v348
    %v350 = vrot.slane %v346, %v349
    %v351 = vmul.f32 %v257, %v350
    %v352 = vmul.f32 %v258, %v350
    %v354 = vlaneseq
    %v355 = vshrl.u32 %v354, 7
    %v356 = vsub.s32 0, %v355
    %v357 = vrot.slane %v70, %v356
    %v359 = vadd.f32 %v351, %v357
    %v360 = vadd.f32 %v352, %v357
    %v361 = vmin.f32 %v359, 20.0
    %v362 = vmin.f32 %v360, 20.0
    %v363 = vmul.f32 %v361, 1.442695
    %v364 = vpow.pop %v363
    %v365 = vmul.f32 %v362, 1.442695
    %v366 = vpow.pop %v365
    %v367 = vadd.f32 %v364, 2.0
    %v368 = vadd.f32 %v366, 2.0
    %v369 = vmul.f32 %v364, %v367
    %v370 = vmul.f32 %v366, %v368
    %v371 = vmul.f32 %v359, %v369
    %v372 = vmul.f32 %v360, %v370
    %v373 = vadd.f32 %v369, 2.0
    %v374 = vadd.f32 %v370, 2.0
    %v375 = vrcp.pop %v373
    %v376 = vmul.f32 %v371, %v375
    %v377 = vrcp.pop %v374
    %v378 = vmul.f32 %v372, %v377
    %vm379 = vcmp.gt.f32.partialorder %v359, 20.0
    %vm380 = vcmp.gt.f32.partialorder %v360, 20.0
    %v381 = vsel %vm379, %v359, %v376
    %v382 = vsel %vm380, %v360, %v378
    %383 = vst.msk [vmem:[#allocation8] sm:$0xff] %vm169, %v381
    %384 = vst.msk [vmem:[#allocation8 + $0x8] sm:$0xff] %vm169, %v382
    %s385 = scalar_lea.vmem [#allocation2], 16
    %v386 = vld [vmem:[%s385] sm:$0xff]
    %v387 = vld [vmem:[%s385 + $0x8] sm:$0xff]
    %v389 = vsel %vm83, %v386, 0
    %v392 = vsel %vm83, %v387, 0
    %394 = vmatprep.subr.mxu0 0.0
    %395 = vmatpush1.msra.mxu0 %v65
    %396 = vmatprep.subr.mxu0 0.0
    %397 = vmatpush1.msra.mxu0 %v66
    %398 = vmatprep.subr.mxu0 0.0
    %399 = vmatpush1.msra.mxu0 %v92
    %400 = vmatprep.subr.mxu0 0.0
    %401 = vmatpush1.msra.mxu0 0.0
    %402 = vmatprep.subr.mxu0 0.0
    %403 = vmatpush1.msra.mxu0 0.0
    %404 = vmatprep.subr.mxu0 0.0
    %405 = vmatpush1.msra.mxu0 0.0
    %406 = vmatprep.subr.mxu0 0.0
    %407 = vmatpush1.msra.mxu0 0.0
    %408 = vmatprep.subr.mxu0 0.0
    %409 = vmatpush1.msra.mxu0 0.0
    %410 = vmatprep.subr.mxu0 0.0
    %411 = vmatpush1.msra.mxu0 0.0
    %412 = vmatprep.subr.mxu0 0.0
    %413 = vmatpush1.msra.mxu0 0.0
    %414 = vmatprep.subr.mxu0 0.0
    %415 = vmatpush1.msra.mxu0 0.0
    %416 = vmatprep.subr.mxu0 0.0
    %417 = vmatpush1.msra.mxu0 0.0
    %418 = vmatprep.subr.mxu0 0.0
    %419 = vmatpush1.msra.mxu0 0.0
    %420 = vmatprep.subr.mxu0 0.0
    %421 = vmatpush1.msra.mxu0 0.0
    %422 = vmatprep.subr.mxu0 0.0
    %423 = vmatpush1.msra.mxu0 0.0
    %424 = vmatprep.subr.mxu0 0.0
    %425 = vmatpush1.msra.mxu0 0.0
    %426 = vmatprep.subr.mxu0 0.0
    %427 = vmatpush1.msra.mxu0 0.0
    %428 = vmatprep.subr.mxu0 0.0
    %429 = vmatpush1.msra.mxu0 0.0
    %430 = vmatprep.subr.mxu0 0.0
    %431 = vmatpush1.msra.mxu0 0.0
    %432 = vmatprep.subr.mxu0 0.0
    %433 = vmatpush1.msra.mxu0 0.0
    %434 = vmatprep.subr.mxu0 0.0
    %435 = vmatpush1.msra.mxu0 0.0
    %436 = vmatprep.subr.mxu0 0.0
    %437 = vmatpush1.msra.mxu0 0.0
    %438 = vmatprep.subr.mxu0 0.0
    %439 = vmatpush1.msra.mxu0 0.0
    %440 = vmatprep.subr.mxu0 0.0
    %441 = vmatpush1.msra.mxu0 0.0
    %442 = vmatprep.subr.mxu0 0.0
    %443 = vmatpush1.msra.mxu0 0.0
    %444 = vmatprep.subr.mxu0 0.0
    %445 = vmatpush1.msra.mxu0 0.0
    %446 = vmatprep.subr.mxu0 0.0
    %447 = vmatpush1.msra.mxu0 0.0
    %448 = vmatprep.subr.mxu0 0.0
    %449 = vmatpush1.msra.mxu0 0.0
    %450 = vmatprep.subr.mxu0 0.0
    %451 = vmatpush1.msra.mxu0 0.0
    %452 = vmatprep.subr.mxu0 0.0
    %453 = vmatpush1.msra.mxu0 0.0
    %454 = vmatprep.subr.mxu0 0.0
    %455 = vmatpush1.msra.mxu0 0.0
    %456 = vmatprep.subr.mxu0 0.0
    %457 = vmatpush1.msra.mxu0 0.0
    %458 = vmatprep.mubr.f32.mxu0 0.0
    %459 = vmatmul.mubr.f32.gmra.mrb[0].mxu0 %v389
    %v460 = vpop.f32.mrb[0].mxu0
    %v461 = vadd.f32 %v81, %v460
    %v462 = vpop.f32.mrb[0].mxu0
    %463 = vmatprep.mubr.f32.mxu0 0.0
    %464 = vmatmul.mubr.f32.gmra.mrb[0].mxu0 %v392
    %v465 = vpop.f32.mrb[0].mxu0
    %v466 = vadd.f32 %v81, %v465
    %v467 = vpop.f32.mrb[0].mxu0
    %468 = vdwg.mxu0
    %v469 = vsel %vm169, %v461, 0.0
    %v470 = vsel %vm169, %v466, 0.0
    %v471 = vadd.f32 %v469, %v470
    %v472 = vrot.slane %v471, 4
    %v473 = vadd.f32 %v471, %v472
    %v474 = vrot.slane %v473, 2
    %v475 = vadd.f32 %v473, %v474
    %v476 = vrot.slane %v475, 1
    %v477 = vadd.f32 %v475, %v476
    %v479 = vsel %vm169, %v477, 0
    %481 = vmatprep.subr.mxu0 0.0
    %482 = vmatpush1.msra.mxu0 %v71
    %483 = vmatprep.subr.mxu0 0.0
    %484 = vmatpush1.msra.mxu0 %v72
    %485 = vmatprep.subr.mxu0 0.0
    %486 = vmatpush1.msra.mxu0 %v73
    %487 = vmatprep.subr.mxu0 0.0
    %488 = vmatpush1.msra.mxu0 %v74
    %489 = vmatprep.subr.mxu0 0.0
    %490 = vmatpush1.msra.mxu0 0.0
    %491 = vmatprep.subr.mxu0 0.0
    %492 = vmatpush1.msra.mxu0 0.0
    %493 = vmatprep.subr.mxu0 0.0
    %494 = vmatpush1.msra.mxu0 0.0
    %495 = vmatprep.subr.mxu0 0.0
    %496 = vmatpush1.msra.mxu0 0.0
    %497 = vmatprep.subr.mxu0 0.0
    %498 = vmatpush1.msra.mxu0 0.0
    %499 = vmatprep.subr.mxu0 0.0
    %500 = vmatpush1.msra.mxu0 0.0
    %501 = vmatprep.subr.mxu0 0.0
    %502 = vmatpush1.msra.mxu0 0.0
    %503 = vmatprep.subr.mxu0 0.0
    %504 = vmatpush1.msra.mxu0 0.0
    %505 = vmatprep.subr.mxu0 0.0
    %506 = vmatpush1.msra.mxu0 0.0
    %507 = vmatprep.subr.mxu0 0.0
    %508 = vmatpush1.msra.mxu0 0.0
    %509 = vmatprep.subr.mxu0 0.0
    %510 = vmatpush1.msra.mxu0 0.0
    %511 = vmatprep.subr.mxu0 0.0
    %512 = vmatpush1.msra.mxu0 0.0
    %513 = vmatprep.subr.mxu0 0.0
    %514 = vmatpush1.msra.mxu0 0.0
    %515 = vmatprep.subr.mxu0 0.0
    %516 = vmatpush1.msra.mxu0 0.0
    %517 = vmatprep.subr.mxu0 0.0
    %518 = vmatpush1.msra.mxu0 0.0
    %519 = vmatprep.subr.mxu0 0.0
    %520 = vmatpush1.msra.mxu0 0.0
    %521 = vmatprep.subr.mxu0 0.0
    %522 = vmatpush1.msra.mxu0 0.0
    %523 = vmatprep.subr.mxu0 0.0
    %524 = vmatpush1.msra.mxu0 0.0
    %525 = vmatprep.subr.mxu0 0.0
    %526 = vmatpush1.msra.mxu0 0.0
    %527 = vmatprep.subr.mxu0 0.0
    %528 = vmatpush1.msra.mxu0 0.0
    %529 = vmatprep.subr.mxu0 0.0
    %530 = vmatpush1.msra.mxu0 0.0
    %531 = vmatprep.subr.mxu0 0.0
    %532 = vmatpush1.msra.mxu0 0.0
    %533 = vmatprep.subr.mxu0 0.0
    %534 = vmatpush1.msra.mxu0 0.0
    %535 = vmatprep.subr.mxu0 0.0
    %536 = vmatpush1.msra.mxu0 0.0
    %537 = vmatprep.subr.mxu0 0.0
    %538 = vmatpush1.msra.mxu0 0.0
    %539 = vmatprep.subr.mxu0 0.0
    %540 = vmatpush1.msra.mxu0 0.0
    %541 = vmatprep.subr.mxu0 0.0
    %542 = vmatpush1.msra.mxu0 0.0
    %543 = vmatprep.subr.mxu0 0.0
    %544 = vmatpush1.msra.mxu0 0.0
    %545 = vmatprep.mubr.f32.mxu0 0.0
    %546 = vmatmul.mubr.f32.gmra.mrb[0].mxu0 %v479
    %v547 = vpop.f32.mrb[0].mxu0
    %v548 = vadd.f32 0.0, %v547
    %v549 = vpop.f32.mrb[0].mxu0
    %550 = vdwg.mxu0
    %v551 = vmul.f32 %v548, 0.015625
    %v552 = vlaneseq
    %v553 = vshrl.u32 %v552, 7
    %v554 = vsub.s32 0, %v553
    %v555 = vrot.slane %v551, %v554
    %v556 = vsub.f32 %v461, %v555
    %v557 = vsub.f32 %v466, %v555
    %v558 = vmul.f32 %v556, %v556
    %v559 = vmul.f32 %v557, %v557
    %v560 = vsel %vm169, %v558, 0.0
    %v561 = vsel %vm169, %v559, 0.0
    %v562 = vadd.f32 %v560, %v561
    %v563 = vrot.slane %v562, 4
    %v564 = vadd.f32 %v562, %v563
    %v565 = vrot.slane %v564, 2
    %v566 = vadd.f32 %v564, %v565
    %v567 = vrot.slane %v566, 1
    %v568 = vadd.f32 %v566, %v567
    %v570 = vsel %vm169, %v568, 0
    %572 = vmatprep.subr.mxu0 0.0
    %573 = vmatpush1.msra.mxu0 %v71
    %574 = vmatprep.subr.mxu0 0.0
    %575 = vmatpush1.msra.mxu0 %v72
    %576 = vmatprep.subr.mxu0 0.0
    %577 = vmatpush1.msra.mxu0 %v73
    %578 = vmatprep.subr.mxu0 0.0
    %579 = vmatpush1.msra.mxu0 %v74
    %580 = vmatprep.subr.mxu0 0.0
    %581 = vmatpush1.msra.mxu0 0.0
    %582 = vmatprep.subr.mxu0 0.0
    %583 = vmatpush1.msra.mxu0 0.0
    %584 = vmatprep.subr.mxu0 0.0
    %585 = vmatpush1.msra.mxu0 0.0
    %586 = vmatprep.subr.mxu0 0.0
    %587 = vmatpush1.msra.mxu0 0.0
    %588 = vmatprep.subr.mxu0 0.0
    %589 = vmatpush1.msra.mxu0 0.0
    %590 = vmatprep.subr.mxu0 0.0
    %591 = vmatpush1.msra.mxu0 0.0
    %592 = vmatprep.subr.mxu0 0.0
    %593 = vmatpush1.msra.mxu0 0.0
    %594 = vmatprep.subr.mxu0 0.0
    %595 = vmatpush1.msra.mxu0 0.0
    %596 = vmatprep.subr.mxu0 0.0
    %597 = vmatpush1.msra.mxu0 0.0
    %598 = vmatprep.subr.mxu0 0.0
    %599 = vmatpush1.msra.mxu0 0.0
    %600 = vmatprep.subr.mxu0 0.0
    %601 = vmatpush1.msra.mxu0 0.0
    %602 = vmatprep.subr.mxu0 0.0
    %603 = vmatpush1.msra.mxu0 0.0
    %604 = vmatprep.subr.mxu0 0.0
    %605 = vmatpush1.msra.mxu0 0.0
    %606 = vmatprep.subr.mxu0 0.0
    %607 = vmatpush1.msra.mxu0 0.0
    %608 = vmatprep.subr.mxu0 0.0
    %609 = vmatpush1.msra.mxu0 0.0
    %610 = vmatprep.subr.mxu0 0.0
    %611 = vmatpush1.msra.mxu0 0.0
    %612 = vmatprep.subr.mxu0 0.0
    %613 = vmatpush1.msra.mxu0 0.0
    %614 = vmatprep.subr.mxu0 0.0
    %615 = vmatpush1.msra.mxu0 0.0
    %616 = vmatprep.subr.mxu0 0.0
    %617 = vmatpush1.msra.mxu0 0.0
    %618 = vmatprep.subr.mxu0 0.0
    %619 = vmatpush1.msra.mxu0 0.0
    %620 = vmatprep.subr.mxu0 0.0
    %621 = vmatpush1.msra.mxu0 0.0
    %622 = vmatprep.subr.mxu0 0.0
    %623 = vmatpush1.msra.mxu0 0.0
    %624 = vmatprep.subr.mxu0 0.0
    %625 = vmatpush1.msra.mxu0 0.0
    %626 = vmatprep.subr.mxu0 0.0
    %627 = vmatpush1.msra.mxu0 0.0
    %628 = vmatprep.subr.mxu0 0.0
    %629 = vmatpush1.msra.mxu0 0.0
    %630 = vmatprep.subr.mxu0 0.0
    %631 = vmatpush1.msra.mxu0 0.0
    %632 = vmatprep.subr.mxu0 0.0
    %633 = vmatpush1.msra.mxu0 0.0
    %634 = vmatprep.subr.mxu0 0.0
    %635 = vmatpush1.msra.mxu0 0.0
    %636 = vmatprep.mubr.f32.mxu0 0.0
    %637 = vmatmul.mubr.f32.gmra.mrb[0].mxu0 %v570
    %v638 = vpop.f32.mrb[0].mxu0
    %v639 = vadd.f32 0.0, %v638
    %v640 = vpop.f32.mrb[0].mxu0
    %641 = vdwg.mxu0
    %v642 = vmul.f32 %v639, 0.015625
    %v643 = vadd.f32 %v642, 1e-05
    %v644 = vrsqrt.pop %v643
    %v645 = vmul.f32 %v644, %v69
    %v646 = vlaneseq
    %v647 = vshrl.u32 %v646, 7
    %v648 = vsub.s32 0, %v647
    %v649 = vrot.slane %v645, %v648
    %v650 = vmul.f32 %v556, %v649
    %v651 = vmul.f32 %v557, %v649
    %v652 = vadd.f32 %v650, %v357
    %v653 = vadd.f32 %v651, %v357
    %v654 = vmin.f32 %v652, 20.0
    %v655 = vmin.f32 %v653, 20.0
    %v656 = vmul.f32 %v654, 1.442695
    %v657 = vpow.pop %v656
    %v658 = vmul.f32 %v655, 1.442695
    %v659 = vpow.pop %v658
    %v660 = vadd.f32 %v657, 2.0
    %v661 = vadd.f32 %v659, 2.0
    %v662 = vmul.f32 %v657, %v660
    %v663 = vmul.f32 %v659, %v661
    %v664 = vmul.f32 %v652, %v662
    %v665 = vmul.f32 %v653, %v663
    %v666 = vadd.f32 %v662, 2.0
    %v667 = vadd.f32 %v663, 2.0
    %v668 = vrcp.pop %v666
    %v669 = vmul.f32 %v664, %v668
    %v670 = vrcp.pop %v667
    %v671 = vmul.f32 %v665, %v670
    %vm672 = vcmp.gt.f32.partialorder %v652, 20.0
    %vm673 = vcmp.gt.f32.partialorder %v653, 20.0
    %v674 = vsel %vm672, %v652, %v669
    %v675 = vsel %vm673, %v653, %v671
    %s676 = scalar_lea.vmem [#allocation8], 16
    %677 = vst.msk [vmem:[%s676] sm:$0xff] %vm169, %v674
    %678 = vst.msk [vmem:[%s676 + $0x8] sm:$0xff] %vm169, %v675
    // Predicated region
    $region38: #{tpu_custom_call.1} parent=1 // pred_check
      _
    $region39: #{tpu_custom_call.1} parent=1 // pred_check_branch
      %680 = sbr.rel (0) target = $region41
    $region40: #{tpu_custom_call.1} parent=1 // pred_region
      %s682 = ssub.s32 512, 512
      %683 = vsyncadd [#allocation4], %s682
      %s684 = sshll.u32 [#allocation8], 4
      %s685 = int_to_ptr.vmem [resolvable:$true] %s684
      %690 = dma.vmem_to_hbm [thread:$0]  %s685, 512, %s6, [#allocation4], 128, 128, 8
    $region41: #{tpu_custom_call.1} parent=1 // pred_fallthru
      _
    // Predicated region
    $region42: #{tpu_custom_call.1} parent=1 // pred_check
      _
    $region43: #{tpu_custom_call.1} parent=1 // pred_check_branch
      %692 = sbr.rel (0) target = $region45
    $region44: #{tpu_custom_call.1} parent=1 // pred_region
      %693 = dma.done [#allocation4], 512
    $region45: #{tpu_custom_call.1} parent=1 // pred_fallthru
      _
    %694 = vsyncpa [#allocation3], 1
    %695 = vsyncpa [#allocation6], 1
    %696 = vsyncpa [#allocation4], 1

</llo_original>
